<compile_context>
chip_gen: v7x
topology: tpu7x:2x2x1
jax: 0.10.0
libtpu: 0.0.40
codegen_flags: <defaults>
</compile_context>

<pallas_src>
import jax
import jax.numpy as jnp
import numpy as np
from jax.experimental import pallas as pl
from jax.experimental.pallas import tpu as pltpu

EPS = 0.003

STATE_DIM = 16
ACTION_DIM = 8
H1 = 512   # fcs1 out
H2 = 256   # fcs2 out
HA = 128   # fca1 out
H3 = 128   # fc2 out


def _critic_kernel(state_ref, action_ref,
                   w_s1_ref, b_s1_ref,
                   w_a1_ref, b_a1_ref,
                   w_s2_ref, b_s2_ref,
                   w2s_ref, w2a_ref, b2_ref,
                   w3_ref, b3_ref,
                   out_ref):
    # s1 = relu(fcs1(state))                       [tm, 512]
    s1 = jnp.dot(state_ref[...], w_s1_ref[...],
                 preferred_element_type=jnp.float32) + b_s1_ref[...]
    s1 = jnp.maximum(s1, 0.0)

    # a1 = relu(fca1(action))                      [tm, 128]
    a1 = jnp.dot(action_ref[...], w_a1_ref[...],
                 preferred_element_type=jnp.float32) + b_a1_ref[...]
    a1 = jnp.maximum(a1, 0.0)

    # s2 = relu(fcs2(s1))                          [tm, 256]
    s2 = jnp.dot(s1, w_s2_ref[...],
                 preferred_element_type=jnp.float32) + b_s2_ref[...]
    s2 = jnp.maximum(s2, 0.0)

    # x2 = relu(cat(s2, a1) @ W2 + b2) == relu(s2@W2_s + a1@W2_a + b2)  [tm, 128]
    x2 = (jnp.dot(s2, w2s_ref[...], preferred_element_type=jnp.float32)
          + jnp.dot(a1, w2a_ref[...], preferred_element_type=jnp.float32)
          + b2_ref[...])
    x2 = jnp.maximum(x2, 0.0)

    # Final 128 -> 1 layer as VPU multiply + lane reduction (keeps the N=1
    # matmul off the MXU), producing a lane-dense [1, tm] row.
    q = jnp.sum(x2 * w3_ref[...], axis=-1)        # [tm]
    x3 = q[None, :] + b3_ref[0]                   # [1, tm]  (b3 scalar in SMEM)
    out_ref[...] = (10.0 * jnp.tanh(0.001 * x3))[None]   # [1, 1, tm]


def critic_forward(state, action, kernel_params, *, tm_max=1024):
    """Q(s, a) -> [n, 1].

    state:  [n, STATE_DIM]  float
    action: [n, ACTION_DIM] float
    """
    (w_s1, b_s1, w_a1, b_a1, w_s2, b_s2,
     w2s, w2a, b2, w3_row, b3) = kernel_params

    n = state.shape[0]
    state = state.astype(jnp.float32)
    action = action.astype(jnp.float32)

    # Adaptive batch tile: small RL batches stay small (no redundant padded
    # rows), large batches use up to a 1024-row tile (fewer grid steps, so
    # less per-step pipeline overhead).  Must stay a multiple of 8 (sublane).
    tm = min(tm_max, ((n + 7) // 8) * 8)
    grid = pl.cdiv(n, tm)

    def resident(x):
        # Full-array block, same block index for every grid step: the
        # weights/biases are DMA'd once and stay VMEM-resident.
        return pl.BlockSpec(x.shape, lambda i: (0,) * x.ndim)

    grid_spec = pltpu.PrefetchScalarGridSpec(
        num_scalar_prefetch=0,
        grid=(grid,),
        in_specs=[
            pl.BlockSpec((tm, STATE_DIM), lambda i: (i, 0)),   # state tile
            pl.BlockSpec((tm, ACTION_DIM), lambda i: (i, 0)),  # action tile
            resident(w_s1),    # [16, 512]
            resident(b_s1),    # [1, 512]
            resident(w_a1),    # [8, 128]
            resident(b_a1),    # [1, 128]
            resident(w_s2),    # [512, 256]
            resident(b_s2),    # [1, 256]
            resident(w2s),     # [256, 128]
            resident(w2a),     # [128, 128]
            resident(b2),      # [1, 128]
            resident(w3_row),  # [1, 128]
            # fc3 bias: single f32 scalar -> SMEM (avoids an (8,128)-padded
            # VMEM tile + resident DMA).
            pl.BlockSpec(memory_space=pltpu.MemorySpace.SMEM),
        ],
        # Lane-dense output slab: one (1, 1, tm) row per grid step (avoids
        # masked 1-lane stores of an [n, 1] output).
        out_specs=pl.BlockSpec((1, 1, tm), lambda i: (i, 0, 0)),
    )

    out = pl.pallas_call(
        _critic_kernel,
        out_shape=jax.ShapeDtypeStruct((grid, 1, tm), jnp.float32),
        grid_spec=grid_spec,
        compiler_params=pltpu.CompilerParams(
            # On v7x, if a profile shows one idle TensorCore, switch this to
            # (pltpu.CORE_PARALLEL,) to shard the batch grid across both TCs;
            # "parallel" is the known-safe default on single-TC v5e/v6e.
            dimension_semantics=("parallel",),
            # Explicit 32 MiB scoped VMEM so v5e's 16 MiB default never caps
            # the tile size (usage at tm=1024 is ~6 MiB).
            vmem_limit_bytes=32 * 1024 * 1024),
    )(state, action, w_s1, b_s1, w_a1, b_a1, w_s2, b_s2,
      w2s, w2a, b2, w3_row, b3)

    # (grid, 1, tm) -> (grid*tm, 1); rows beyond n (ragged last block) are
    # garbage computed from an unspecified partial input block and are
    # sliced off here (rows are fully independent, so valid rows are exact).
    return out.reshape(grid * tm, 1)[:n]


def init_params(key):
    """Deterministic parameter init mirroring the PyTorch __init__ shapes.

    PyTorch Linear stores weight as [out, in]; we build in that convention
    (fanin = in_features) then transpose to [in, out] for the kernel.
    """
    def linear(key, in_f, out_f, w_bound=None):
        kw, kb = jax.random.split(key)
        if w_bound is None:
            w_bound = 1.0 / np.sqrt(in_f)       # fanin_init
        b_bound = 1.0 / np.sqrt(in_f)           # default PyTorch bias init
        w = jax.random.uniform(kw, (out_f, in_f), jnp.float32,
                               -w_bound, w_bound)
        b = jax.random.uniform(kb, (1, out_f), jnp.float32,
                               -b_bound, b_bound)
        return w.T, b                            # [in, out], [1, out]

    k1, k2, k3, k4, k5 = jax.random.split(key, 5)
    w_s1, b_s1 = linear(k1, STATE_DIM, H1)
    w_s2, b_s2 = linear(k2, H1, H2)
    w_a1, b_a1 = linear(k3, ACTION_DIM, HA)
    w2, b2 = linear(k4, H2 + HA, H3)
    w3, b3 = linear(k5, H3, 1, w_bound=EPS)

    # Split fc2's weight into the state-branch and action-branch halves
    # (matches torch.cat((s2, a1), dim=1) ordering).
    w2s, w2a = w2[:H2, :], w2[H2:, :]
    return (w_s1, b_s1, w_s2, b_s2, w_a1, b_a1, w2s, w2a, b2, w3, b3)


def pack_params(params):
    """Build the kernel-side parameter set (row-form w3, scalar b3 for SMEM)."""
    (w_s1, b_s1, w_s2, b_s2, w_a1, b_a1, w2s, w2a, b2, w3, b3) = params
    w3_row = w3.T                      # [1, 128]
    b3_s = b3.reshape((1,))            # (1,) f32 scalar, lives in SMEM
    return (w_s1, b_s1, w_a1, b_a1, w_s2, b_s2, w2s, w2a, b2, w3_row, b3_s)


def reference_forward(state, action, params):
    (w_s1, b_s1, w_s2, b_s2, w_a1, b_a1, w2s, w2a, b2, w3, b3) = params
    s1 = jax.nn.relu(state @ w_s1 + b_s1)
    s2 = jax.nn.relu(s1 @ w_s2 + b_s2)
    a1 = jax.nn.relu(action @ w_a1 + b_a1)
    x = jnp.concatenate([s2, a1], axis=1)
    x2 = jax.nn.relu(x @ jnp.concatenate([w2s, w2a], axis=0) + b2)
    return 10.0 * jnp.tanh(0.001 * (x2 @ w3 + b3))


if __name__ == "__main__":
    key = jax.random.PRNGKey(0)
    kp, _ = jax.random.split(key)

    params = init_params(kp)
    kparams = pack_params(params)

    def run_case(seed, n, **kw):
        ks, ka = jax.random.split(jax.random.PRNGKey(seed))
        state = jax.random.normal(ks, (n, STATE_DIM), jnp.float32)
        action = jax.random.normal(ka, (n, ACTION_DIM), jnp.float32)
        out = jax.block_until_ready(critic_forward(state, action, kparams, **kw))
        ref = reference_forward(state, action, params)
        np.testing.assert_allclose(np.asarray(out), np.asarray(ref),
                                   rtol=1e-5, atol=2e-5)
        assert out.shape == (n, 1)

    # Tiny RL-style batch: adaptive tile (tm = 8), single grid step.
    run_case(0, 8)
    # Multi-tile grid with a ragged (partial) last block: tm=256, grid=3.
    run_case(1, 520, tm_max=256)
    # Default large-batch path: tm=1024, grid=2, heavily partial last block.
    run_case(2, 1040)

    print("KERNEL_OK")
</pallas_src>

<mosaic_0001>
module attributes {stable_mosaic.version = 11 : i64} {
  func.func @_critic_kernel(%arg0: i32, %arg1: memref<8x16xf32, #tpu.memory_space<vmem>>, %arg2: memref<8x8xf32, #tpu.memory_space<vmem>>, %arg3: memref<16x512xf32, #tpu.memory_space<vmem>>, %arg4: memref<1x512xf32, #tpu.memory_space<vmem>>, %arg5: memref<8x128xf32, #tpu.memory_space<vmem>>, %arg6: memref<1x128xf32, #tpu.memory_space<vmem>>, %arg7: memref<512x256xf32, #tpu.memory_space<vmem>>, %arg8: memref<1x256xf32, #tpu.memory_space<vmem>>, %arg9: memref<256x128xf32, #tpu.memory_space<vmem>>, %arg10: memref<128x128xf32, #tpu.memory_space<vmem>>, %arg11: memref<1x128xf32, #tpu.memory_space<vmem>>, %arg12: memref<1x128xf32, #tpu.memory_space<vmem>>, %arg13: memref<1xf32, #tpu.memory_space<smem>>, %arg14: memref<1x1x8xf32, #tpu.memory_space<vmem>>) attributes {dimension_semantics = [#tpu.dimension_semantics<parallel>], iteration_bounds = array<i64: 1>, scalar_prefetch = 0 : i64, scratch_operands = 0 : i64, tpu.core_type = #tpu.core_type<tc>, window_params = [{transform_indices = @transform_0, window_bounds = array<i64: 8, 16>}, {transform_indices = @transform_1, window_bounds = array<i64: 8, 8>}, {pipeline_mode = #tpu.pipeline_mode<synchronous>, transform_indices = @transform_2, window_bounds = array<i64: 16, 512>}, {pipeline_mode = #tpu.pipeline_mode<synchronous>, transform_indices = @transform_3, window_bounds = array<i64: 1, 512>}, {pipeline_mode = #tpu.pipeline_mode<synchronous>, transform_indices = @transform_4, window_bounds = array<i64: 8, 128>}, {pipeline_mode = #tpu.pipeline_mode<synchronous>, transform_indices = @transform_5, window_bounds = array<i64: 1, 128>}, {pipeline_mode = #tpu.pipeline_mode<synchronous>, transform_indices = @transform_6, window_bounds = array<i64: 512, 256>}, {pipeline_mode = #tpu.pipeline_mode<synchronous>, transform_indices = @transform_7, window_bounds = array<i64: 1, 256>}, {pipeline_mode = #tpu.pipeline_mode<synchronous>, transform_indices = @transform_8, window_bounds = array<i64: 256, 128>}, {pipeline_mode = #tpu.pipeline_mode<synchronous>, transform_indices = @transform_9, window_bounds = array<i64: 128, 128>}, {pipeline_mode = #tpu.pipeline_mode<synchronous>, transform_indices = @transform_10, window_bounds = array<i64: 1, 128>}, {pipeline_mode = #tpu.pipeline_mode<synchronous>, transform_indices = @transform_11, window_bounds = array<i64: 1, 128>}, {transform_indices = @transform_12, window_bounds = array<i64: 1>}, {transform_indices = @transform_13, window_bounds = array<i64: 1, 1, 8>}]} {
    %c0 = arith.constant 0 : index
    %c0_0 = arith.constant 0 : index
    %0 = vector.load %arg1[%c0, %c0_0] : memref<8x16xf32, #tpu.memory_space<vmem>>, vector<8x16xf32>
    %c0_1 = arith.constant 0 : index
    %c0_2 = arith.constant 0 : index
    %1 = vector.load %arg3[%c0_1, %c0_2] : memref<16x512xf32, #tpu.memory_space<vmem>>, vector<16x512xf32>
    %cst = arith.constant dense<0.000000e+00> : vector<8x512xf32>
    %2 = tpu.matmul %0, %1, %cst {dimension_numbers = #tpu.dot_dimension_numbers<[1], [0], [0], [1], [0, 0, 1, 1], [], []>} : vector<8x16xf32>, vector<16x512xf32>, vector<8x512xf32> -> vector<8x512xf32>
    %c0_3 = arith.constant 0 : index
    %c0_4 = arith.constant 0 : index
    %3 = vector.load %arg4[%c0_3, %c0_4] : memref<1x512xf32, #tpu.memory_space<vmem>>, vector<1x512xf32>
    %4 = vector.broadcast %3 : vector<1x512xf32> to vector<8x512xf32>
    %5 = arith.addf %2, %4 : vector<8x512xf32>
    %cst_5 = arith.constant 0.000000e+00 : f32
    %6 = vector.broadcast %cst_5 : f32 to vector<8x512xf32>
    %7 = arith.maximumf %5, %6 : vector<8x512xf32>
    %c0_6 = arith.constant 0 : index
    %c0_7 = arith.constant 0 : index
    %8 = vector.load %arg2[%c0_6, %c0_7] : memref<8x8xf32, #tpu.memory_space<vmem>>, vector<8x8xf32>
    %c0_8 = arith.constant 0 : index
    %c0_9 = arith.constant 0 : index
    %9 = vector.load %arg5[%c0_8, %c0_9] : memref<8x128xf32, #tpu.memory_space<vmem>>, vector<8x128xf32>
    %cst_10 = arith.constant dense<0.000000e+00> : vector<8x128xf32>
    %10 = tpu.matmul %8, %9, %cst_10 {dimension_numbers = #tpu.dot_dimension_numbers<[1], [0], [0], [1], [0, 0, 1, 1], [], []>} : vector<8x8xf32>, vector<8x128xf32>, vector<8x128xf32> -> vector<8x128xf32>
    %c0_11 = arith.constant 0 : index
    %c0_12 = arith.constant 0 : index
    %11 = vector.load %arg6[%c0_11, %c0_12] : memref<1x128xf32, #tpu.memory_space<vmem>>, vector<1x128xf32>
    %12 = vector.broadcast %11 : vector<1x128xf32> to vector<8x128xf32>
    %13 = arith.addf %10, %12 : vector<8x128xf32>
    %cst_13 = arith.constant 0.000000e+00 : f32
    %14 = vector.broadcast %cst_13 : f32 to vector<8x128xf32>
    %15 = arith.maximumf %13, %14 : vector<8x128xf32>
    %c0_14 = arith.constant 0 : index
    %c0_15 = arith.constant 0 : index
    %16 = vector.load %arg7[%c0_14, %c0_15] : memref<512x256xf32, #tpu.memory_space<vmem>>, vector<512x256xf32>
    %cst_16 = arith.constant dense<0.000000e+00> : vector<8x256xf32>
    %17 = tpu.matmul %7, %16, %cst_16 {dimension_numbers = #tpu.dot_dimension_numbers<[1], [0], [0], [1], [0, 0, 1, 1], [], []>} : vector<8x512xf32>, vector<512x256xf32>, vector<8x256xf32> -> vector<8x256xf32>
    %c0_17 = arith.constant 0 : index
    %c0_18 = arith.constant 0 : index
    %18 = vector.load %arg8[%c0_17, %c0_18] : memref<1x256xf32, #tpu.memory_space<vmem>>, vector<1x256xf32>
    %19 = vector.broadcast %18 : vector<1x256xf32> to vector<8x256xf32>
    %20 = arith.addf %17, %19 : vector<8x256xf32>
    %cst_19 = arith.constant 0.000000e+00 : f32
    %21 = vector.broadcast %cst_19 : f32 to vector<8x256xf32>
    %22 = arith.maximumf %20, %21 : vector<8x256xf32>
    %c0_20 = arith.constant 0 : index
    %c0_21 = arith.constant 0 : index
    %23 = vector.load %arg9[%c0_20, %c0_21] : memref<256x128xf32, #tpu.memory_space<vmem>>, vector<256x128xf32>
    %cst_22 = arith.constant dense<0.000000e+00> : vector<8x128xf32>
    %24 = tpu.matmul %22, %23, %cst_22 {dimension_numbers = #tpu.dot_dimension_numbers<[1], [0], [0], [1], [0, 0, 1, 1], [], []>} : vector<8x256xf32>, vector<256x128xf32>, vector<8x128xf32> -> vector<8x128xf32>
    %c0_23 = arith.constant 0 : index
    %c0_24 = arith.constant 0 : index
    %25 = vector.load %arg10[%c0_23, %c0_24] : memref<128x128xf32, #tpu.memory_space<vmem>>, vector<128x128xf32>
    %cst_25 = arith.constant dense<0.000000e+00> : vector<8x128xf32>
    %26 = tpu.matmul %15, %25, %cst_25 {dimension_numbers = #tpu.dot_dimension_numbers<[1], [0], [0], [1], [0, 0, 1, 1], [], []>} : vector<8x128xf32>, vector<128x128xf32>, vector<8x128xf32> -> vector<8x128xf32>
    %27 = arith.addf %24, %26 : vector<8x128xf32>
    %c0_26 = arith.constant 0 : index
    %c0_27 = arith.constant 0 : index
    %28 = vector.load %arg11[%c0_26, %c0_27] : memref<1x128xf32, #tpu.memory_space<vmem>>, vector<1x128xf32>
    %29 = vector.broadcast %28 : vector<1x128xf32> to vector<8x128xf32>
    %30 = arith.addf %27, %29 : vector<8x128xf32>
    %cst_28 = arith.constant 0.000000e+00 : f32
    %31 = vector.broadcast %cst_28 : f32 to vector<8x128xf32>
    %32 = arith.maximumf %30, %31 : vector<8x128xf32>
    %c0_29 = arith.constant 0 : index
    %c0_30 = arith.constant 0 : index
    %33 = vector.load %arg12[%c0_29, %c0_30] : memref<1x128xf32, #tpu.memory_space<vmem>>, vector<1x128xf32>
    %34 = vector.broadcast %33 : vector<1x128xf32> to vector<8x128xf32>
    %35 = arith.mulf %32, %34 : vector<8x128xf32>
    %cst_31 = arith.constant dense<0.000000e+00> : vector<8xf32>
    %36 = vector.multi_reduction <add>, %35, %cst_31 [1] : vector<8x128xf32> to vector<8xf32>
    %37 = vector.shape_cast %36 : vector<8xf32> to vector<1x8xf32>
    %c0_32 = arith.constant 0 : index
    %38 = memref.load %arg13[%c0_32] : memref<1xf32, #tpu.memory_space<smem>>
    %39 = vector.broadcast %38 : f32 to vector<1x8xf32>
    %40 = arith.addf %37, %39 : vector<1x8xf32>
    %cst_33 = arith.constant 1.000000e-03 : f32
    %41 = vector.broadcast %cst_33 : f32 to vector<1x8xf32>
    %42 = arith.mulf %41, %40 : vector<1x8xf32>
    %43 = math.tanh %42 : vector<1x8xf32>
    %cst_34 = arith.constant 1.000000e+01 : f32
    %44 = vector.broadcast %cst_34 : f32 to vector<1x8xf32>
    %45 = arith.mulf %44, %43 : vector<1x8xf32>
    %46 = vector.shape_cast %45 : vector<1x8xf32> to vector<1x1x8xf32>
    %c0_35 = arith.constant 0 : index
    %c0_36 = arith.constant 0 : index
    %c0_37 = arith.constant 0 : index
    %47 = vector.load %arg14[%c0_35, %c0_36, %c0_37] : memref<1x1x8xf32, #tpu.memory_space<vmem>>, vector<1x1x8xf32>
    tpu.vector_store %arg14[%c0_35, %c0_36, %c0_37], %46 {strides = array<i32>} : memref<1x1x8xf32, #tpu.memory_space<vmem>>, vector<1x1x8xf32>,
    return
  }
  func.func @transform_0(%arg0: i32) -> (i32, i32) {
    %c0_i32 = arith.constant 0 : i32
    %c0_i32_0 = arith.constant 0 : i32
    return %arg0, %c0_i32 : i32, i32
  }
  func.func @transform_1(%arg0: i32) -> (i32, i32) {
    %c0_i32 = arith.constant 0 : i32
    %c0_i32_0 = arith.constant 0 : i32
    return %arg0, %c0_i32 : i32, i32
  }
  func.func @transform_2(%arg0: i32) -> (i32, i32) {
    %c0_i32 = arith.constant 0 : i32
    %c0_i32_0 = arith.constant 0 : i32
    %c0_i32_1 = arith.constant 0 : i32
    return %c0_i32, %c0_i32_0 : i32, i32
  }
  func.func @transform_3(%arg0: i32) -> (i32, i32) {
    %c0_i32 = arith.constant 0 : i32
    %c0_i32_0 = arith.constant 0 : i32
    %c0_i32_1 = arith.constant 0 : i32
    return %c0_i32, %c0_i32_0 : i32, i32
  }
  func.func @transform_4(%arg0: i32) -> (i32, i32) {
    %c0_i32 = arith.constant 0 : i32
    %c0_i32_0 = arith.constant 0 : i32
    %c0_i32_1 = arith.constant 0 : i32
    return %c0_i32, %c0_i32_0 : i32, i32
  }
  func.func @transform_5(%arg0: i32) -> (i32, i32) {
    %c0_i32 = arith.constant 0 : i32
    %c0_i32_0 = arith.constant 0 : i32
    %c0_i32_1 = arith.constant 0 : i32
    return %c0_i32, %c0_i32_0 : i32, i32
  }
  func.func @transform_6(%arg0: i32) -> (i32, i32) {
    %c0_i32 = arith.constant 0 : i32
    %c0_i32_0 = arith.constant 0 : i32
    %c0_i32_1 = arith.constant 0 : i32
    return %c0_i32, %c0_i32_0 : i32, i32
  }
  func.func @transform_7(%arg0: i32) -> (i32, i32) {
    %c0_i32 = arith.constant 0 : i32
    %c0_i32_0 = arith.constant 0 : i32
    %c0_i32_1 = arith.constant 0 : i32
    return %c0_i32, %c0_i32_0 : i32, i32
  }
  func.func @transform_8(%arg0: i32) -> (i32, i32) {
    %c0_i32 = arith.constant 0 : i32
    %c0_i32_0 = arith.constant 0 : i32
    %c0_i32_1 = arith.constant 0 : i32
    return %c0_i32, %c0_i32_0 : i32, i32
  }
  func.func @transform_9(%arg0: i32) -> (i32, i32) {
    %c0_i32 = arith.constant 0 : i32
    %c0_i32_0 = arith.constant 0 : i32
    %c0_i32_1 = arith.constant 0 : i32
    return %c0_i32, %c0_i32_0 : i32, i32
  }
  func.func @transform_10(%arg0: i32) -> (i32, i32) {
    %c0_i32 = arith.constant 0 : i32
    %c0_i32_0 = arith.constant 0 : i32
    %c0_i32_1 = arith.constant 0 : i32
    return %c0_i32, %c0_i32_0 : i32, i32
  }
  func.func @transform_11(%arg0: i32) -> (i32, i32) {
    %c0_i32 = arith.constant 0 : i32
    %c0_i32_0 = arith.constant 0 : i32
    %c0_i32_1 = arith.constant 0 : i32
    return %c0_i32, %c0_i32_0 : i32, i32
  }
  func.func @transform_12(%arg0: i32) -> i32 {
    %c0_i32 = arith.constant 0 : i32
    %c0_i32_0 = arith.constant 0 : i32
    return %c0_i32 : i32
  }
  func.func @transform_13(%arg0: i32) -> (i32, i32, i32) {
    %c0_i32 = arith.constant 0 : i32
    %c0_i32_0 = arith.constant 0 : i32
    %c0_i32_1 = arith.constant 0 : i32
    return %arg0, %c0_i32, %c0_i32_0 : i32, i32, i32
  }
}

</mosaic_0001>

<llo_original>
// kernel: tpu_custom_call.1
$region0: #{tpu_custom_call.1}
  #allocation0 [shape = 'u32[]', space=smem, size = 0x4, offset = 0x4, fixed_abs, tag = 'smem constant byte address 0x4 - core index']
  #allocation1 [shape = 'u32[144,128]{1,0:T(1,128)}', space=vmem, size = 0x12000, scoped, tag = 'internal scratch']
  #allocation2 [shape = 'f32[1]{0:T(128)S(6)}', space=smem, size = 0x200, scoped, tag = 'scoped memory for tpu_custom_call.1']
  %s0 = inlined_call_operand.hbm [shape: f32[8,16], index: 0, kind: input, shape index: {}]
  %s1 = inlined_call_operand.hbm [shape: f32[8,8], index: 1, kind: input, shape index: {}]
  %s2 = inlined_call_operand.hbm [shape: f32[16,512], index: 2, kind: input, shape index: {}]
  %s3 = inlined_call_operand.vmem [shape: f32[1,512], index: 3, kind: input, shape index: {}]
  %s4 = inlined_call_operand.vmem [shape: f32[8,128], index: 4, kind: input, shape index: {}]
  %s5 = inlined_call_operand.vmem [shape: f32[1,128], index: 5, kind: input, shape index: {}]
  %s6 = inlined_call_operand.hbm [shape: f32[512,256], index: 6, kind: input, shape index: {}]
  %s7 = inlined_call_operand.vmem [shape: f32[1,256], index: 7, kind: input, shape index: {}]
  %s8 = inlined_call_operand.hbm [shape: f32[256,128], index: 8, kind: input, shape index: {}]
  %s9 = inlined_call_operand.hbm [shape: f32[128,128], index: 9, kind: input, shape index: {}]
  %s10 = inlined_call_operand.vmem [shape: f32[1,128], index: 10, kind: input, shape index: {}]
  %s11 = inlined_call_operand.vmem [shape: f32[1,128], index: 11, kind: input, shape index: {}]
  %s12 = inlined_call_operand.<no memory space> [shape: f32[1], index: 12, kind: input, shape index: {}]
  %s13 = inlined_call_operand.hbm [shape: f32[1,1,8], index: 13, kind: output, shape index: {}]
  %s14 = sld [smem:[#allocation0]]
  $region86: #{tpu_custom_call.1} parent=0
    _
  %s16 = ssub.s32 1, %s14
  %s17 = scalar_select 0, %s16, %s14
  %18 = sst [smem:[#allocation2]] %s12
  $region1: #{tpu_custom_call.1} parent=0
    #allocation3 [shape = 'u8[4096]{0}', space=vmem, size = 0x1000, scoped, tag = 'input window, operand 0, single buffered']
    #allocation4 [shape = 's32[1]{0}', space=sflag, size = 0x4, scoped, tag = 'scoped memory for tpu_custom_call.1']
    #allocation5 [shape = 's32[1]{0}', space=sflag, size = 0x4, scoped, tag = 'scoped memory for tpu_custom_call.1']
    #allocation6 [shape = 'u8[4096]{0}', space=vmem, size = 0x1000, scoped, tag = 'input window, operand 1, single buffered']
    #allocation7 [shape = 's32[1]{0}', space=sflag, size = 0x4, scoped, tag = 'scoped memory for tpu_custom_call.1']
    #allocation8 [shape = 'u8[32768]{0}', space=vmem, size = 0x8000, scoped, tag = 'input window, operand 2, single buffered']
    #allocation9 [shape = 'u8[524288]{0}', space=vmem, size = 0x80000, scoped, tag = 'input window, operand 6, single buffered']
    #allocation10 [shape = 's32[1]{0}', space=sflag, size = 0x4, scoped, tag = 'scoped memory for tpu_custom_call.1']
    #allocation11 [shape = 'u8[131072]{0}', space=vmem, size = 0x20000, scoped, tag = 'input window, operand 8, single buffered']
    #allocation12 [shape = 'u8[65536]{0}', space=vmem, size = 0x10000, scoped, tag = 'input window, operand 9, single buffered']
    #allocation13 [shape = 's32[1]{0}', space=sflag, size = 0x4, scoped, tag = 'scoped memory for tpu_custom_call.1']
    #allocation14 [shape = 'u8[512]{0}', space=vmem, size = 0x400, scoped, tag = 'output window, operand 0, single buffered']
    %19 = vsyncpa [#allocation4], 0
    %20 = vsyncpa [#allocation7], 0
    %21 = vsyncpa [#allocation10], 0
    %22 = vsyncpa [#allocation13], 0
    %23 = vsyncpa [#allocation5], 0
    // Predicated region
    $region2: #{tpu_custom_call.1} parent=1 // pred_check
      _
    $region3: #{tpu_custom_call.1} parent=1 // pred_check_branch
      %25 = sbr.rel (0) target = $region5
    $region4: #{tpu_custom_call.1} parent=1 // pred_region
      %s27 = ssub.s32 128, 128
      %28 = vsyncadd [#allocation4], %s27
      %s30 = sshll.u32 [#allocation3], 4
      %s31 = int_to_ptr.vmem [resolvable:$true] %s30
      %33 = dma.hbm_to_vmem [thread:$0]  %s0, 128, %s31, [#allocation4]
    $region5: #{tpu_custom_call.1} parent=1 // pred_fallthru
      _
    // Predicated region
    $region6: #{tpu_custom_call.1} parent=1 // pred_check
      _
    $region7: #{tpu_custom_call.1} parent=1 // pred_check_branch
      %35 = sbr.rel (0) target = $region9
    $region8: #{tpu_custom_call.1} parent=1 // pred_region
      %s37 = ssub.s32 128, 128
      %38 = vsyncadd [#allocation7], %s37
      %s40 = sshll.u32 [#allocation6], 4
      %s41 = int_to_ptr.vmem [resolvable:$true] %s40
      %43 = dma.hbm_to_vmem [thread:$0]  %s1, 128, %s41, [#allocation7]
    $region9: #{tpu_custom_call.1} parent=1 // pred_fallthru
      _
    // Predicated region
    $region10: #{tpu_custom_call.1} parent=1 // pred_check
      _
    $region11: #{tpu_custom_call.1} parent=1 // pred_check_branch
      %45 = sbr.rel (0) target = $region13
    $region12: #{tpu_custom_call.1} parent=1 // pred_region
      %s47 = ssub.s32 1024, 1024
      %48 = vsyncadd [#allocation7], %s47
      %s49 = sshll.u32 [#allocation8], 4
      %s50 = int_to_ptr.vmem [resolvable:$true] %s49
      %55 = dma.hbm_to_vmem [thread:$0]  %s2, 1024, %s50, [#allocation7], 512, 512, 32
    $region13: #{tpu_custom_call.1} parent=1 // pred_fallthru
      _
    // Predicated region
    $region14: #{tpu_custom_call.1} parent=1 // pred_check
      _
    $region15: #{tpu_custom_call.1} parent=1 // pred_check_branch
      %57 = sbr.rel (0) target = $region17
    $region16: #{tpu_custom_call.1} parent=1 // pred_region
      _
    $region17: #{tpu_custom_call.1} parent=1 // pred_fallthru
      _
    // Predicated region
    $region18: #{tpu_custom_call.1} parent=1 // pred_check
      _
    $region19: #{tpu_custom_call.1} parent=1 // pred_check_branch
      %59 = sbr.rel (0) target = $region21
    $region20: #{tpu_custom_call.1} parent=1 // pred_region
      _
    $region21: #{tpu_custom_call.1} parent=1 // pred_fallthru
      _
    // Predicated region
    $region22: #{tpu_custom_call.1} parent=1 // pred_check
      _
    $region23: #{tpu_custom_call.1} parent=1 // pred_check_branch
      %61 = sbr.rel (0) target = $region25
    $region24: #{tpu_custom_call.1} parent=1 // pred_region
      _
    $region25: #{tpu_custom_call.1} parent=1 // pred_fallthru
      _
    // Predicated region
    $region26: #{tpu_custom_call.1} parent=1 // pred_check
      _
    $region27: #{tpu_custom_call.1} parent=1 // pred_check_branch
      %63 = sbr.rel (0) target = $region29
    $region28: #{tpu_custom_call.1} parent=1 // pred_region
      %s65 = ssub.s32 16384, 16384
      %66 = vsyncadd [#allocation10], %s65
      %s67 = sshll.u32 [#allocation9], 4
      %s68 = int_to_ptr.vmem [resolvable:$true] %s67
      %73 = dma.hbm_to_vmem [thread:$0]  %s6, 16384, %s68, [#allocation10], 256, 256, 16
    $region29: #{tpu_custom_call.1} parent=1 // pred_fallthru
      _
    // Predicated region
    $region30: #{tpu_custom_call.1} parent=1 // pred_check
      _
    $region31: #{tpu_custom_call.1} parent=1 // pred_check_branch
      %75 = sbr.rel (0) target = $region33
    $region32: #{tpu_custom_call.1} parent=1 // pred_region
      _
    $region33: #{tpu_custom_call.1} parent=1 // pred_fallthru
      _
    // Predicated region
    $region34: #{tpu_custom_call.1} parent=1 // pred_check
      _
    $region35: #{tpu_custom_call.1} parent=1 // pred_check_branch
      %77 = sbr.rel (0) target = $region37
    $region36: #{tpu_custom_call.1} parent=1 // pred_region
      %s79 = ssub.s32 4096, 4096
      %80 = vsyncadd [#allocation10], %s79
      %s81 = sshll.u32 [#allocation11], 4
      %s82 = int_to_ptr.vmem [resolvable:$true] %s81
      %87 = dma.hbm_to_vmem [thread:$0]  %s8, 4096, %s82, [#allocation10], 128, 128, 8
    $region37: #{tpu_custom_call.1} parent=1 // pred_fallthru
      _
    // Predicated region
    $region38: #{tpu_custom_call.1} parent=1 // pred_check
      _
    $region39: #{tpu_custom_call.1} parent=1 // pred_check_branch
      %89 = sbr.rel (0) target = $region41
    $region40: #{tpu_custom_call.1} parent=1 // pred_region
      %s91 = ssub.s32 2048, 2048
      %92 = vsyncadd [#allocation13], %s91
      %s93 = sshll.u32 [#allocation12], 4
      %s94 = int_to_ptr.vmem [resolvable:$true] %s93
      %99 = dma.hbm_to_vmem [thread:$0]  %s9, 2048, %s94, [#allocation13], 128, 128, 8
    $region41: #{tpu_custom_call.1} parent=1 // pred_fallthru
      _
    // Predicated region
    $region42: #{tpu_custom_call.1} parent=1 // pred_check
      _
    $region43: #{tpu_custom_call.1} parent=1 // pred_check_branch
      %101 = sbr.rel (0) target = $region45
    $region44: #{tpu_custom_call.1} parent=1 // pred_region
      _
    $region45: #{tpu_custom_call.1} parent=1 // pred_fallthru
      _
    // Predicated region
    $region46: #{tpu_custom_call.1} parent=1 // pred_check
      _
    $region47: #{tpu_custom_call.1} parent=1 // pred_check_branch
      %103 = sbr.rel (0) target = $region49
    $region48: #{tpu_custom_call.1} parent=1 // pred_region
      _
    $region49: #{tpu_custom_call.1} parent=1 // pred_fallthru
      _
    // Predicated region
    $region50: #{tpu_custom_call.1} parent=1 // pred_check
      _
    $region51: #{tpu_custom_call.1} parent=1 // pred_check_branch
      %105 = sbr.rel (0) target = $region53
    $region52: #{tpu_custom_call.1} parent=1 // pred_region
      _
    $region53: #{tpu_custom_call.1} parent=1 // pred_fallthru
      _
    // Predicated region
    $region54: #{tpu_custom_call.1} parent=1 // pred_check
      _
    $region55: #{tpu_custom_call.1} parent=1 // pred_check_branch
      %107 = sbr.rel (0) target = $region57
    $region56: #{tpu_custom_call.1} parent=1 // pred_region
      %108 = dma.done [#allocation4], 128
    $region57: #{tpu_custom_call.1} parent=1 // pred_fallthru
      _
    // Predicated region
    $region58: #{tpu_custom_call.1} parent=1 // pred_check
      _
    $region59: #{tpu_custom_call.1} parent=1 // pred_check_branch
      %110 = sbr.rel (0) target = $region61
    $region60: #{tpu_custom_call.1} parent=1 // pred_region
      %111 = dma.done [#allocation7], 128
    $region61: #{tpu_custom_call.1} parent=1 // pred_fallthru
      _
    // Predicated region
    $region62: #{tpu_custom_call.1} parent=1 // pred_check
      _
    $region63: #{tpu_custom_call.1} parent=1 // pred_check_branch
      %113 = sbr.rel (0) target = $region65
    $region64: #{tpu_custom_call.1} parent=1 // pred_region
      %114 = dma.done [#allocation7], 1024
    $region65: #{tpu_custom_call.1} parent=1 // pred_fallthru
      _
    // Predicated region
    $region66: #{tpu_custom_call.1} parent=1 // pred_check
      _
    $region67: #{tpu_custom_call.1} parent=1 // pred_check_branch
      %116 = sbr.rel (0) target = $region69
    $region68: #{tpu_custom_call.1} parent=1 // pred_region
      %117 = dma.done [#allocation10], 16384
    $region69: #{tpu_custom_call.1} parent=1 // pred_fallthru
      _
    // Predicated region
    $region70: #{tpu_custom_call.1} parent=1 // pred_check
      _
    $region71: #{tpu_custom_call.1} parent=1 // pred_check_branch
      %119 = sbr.rel (0) target = $region73
    $region72: #{tpu_custom_call.1} parent=1 // pred_region
      %120 = dma.done [#allocation10], 4096
    $region73: #{tpu_custom_call.1} parent=1 // pred_fallthru
      _
    // Predicated region
    $region74: #{tpu_custom_call.1} parent=1 // pred_check
      _
    $region75: #{tpu_custom_call.1} parent=1 // pred_check_branch
      %122 = sbr.rel (0) target = $region77
    $region76: #{tpu_custom_call.1} parent=1 // pred_region
      %123 = dma.done [#allocation13], 2048
    $region77: #{tpu_custom_call.1} parent=1 // pred_fallthru
      _
    %v124 = vld [vmem:[#allocation3] sm:$0xff]
    %v125 = vld [vmem:[#allocation8] sm:$0xff]
    %v126 = vld [vmem:[#allocation8 + $0x8] sm:$0xff]
    %v127 = vld [vmem:[#allocation8 + $0x10] sm:$0xff]
    %v128 = vld [vmem:[#allocation8 + $0x18] sm:$0xff]
    %v129 = vld [vmem:[#allocation8 + $0x20] sm:$0xff]
    %v130 = vld [vmem:[#allocation8 + $0x28] sm:$0xff]
    %v131 = vld [vmem:[#allocation8 + $0x30] sm:$0xff]
    %v132 = vld [vmem:[#allocation8 + $0x38] sm:$0xff]
    %v133 = vld [vmem:[%s3] sm:$0xf]
    %v135 = vlaneseq
    %v136 = vshrl.u32 %v135, 7
    %v137 = vsub.s32 0, %v136
    %v138 = vrot.slane %v133, %v137
    %v139 = vlaneseq
    %v140 = vshrl.u32 %v139, 7
    %v141 = vsub.s32 1, %v140
    %v142 = vrot.slane %v133, %v141
    %v143 = vlaneseq
    %v144 = vshrl.u32 %v143, 7
    %v145 = vsub.s32 2, %v144
    %v146 = vrot.slane %v133, %v145
    %v147 = vlaneseq
    %v148 = vshrl.u32 %v147, 7
    %v149 = vsub.s32 3, %v148
    %v150 = vrot.slane %v133, %v149
    %vm155 = vcmask 130048
    %v157 = vsel %vm155, %v124, 0
    %159 = vmatprep.subr.mxu0 %v126
    %160 = vmatpush1.msra.mxu0 %v125
    %161 = vmatprep.subr.mxu0 %v130
    %162 = vmatpush1.msra.mxu0 %v129
    %163 = vmatprep.subr.mxu0 0.0
    %164 = vmatpush1.msra.mxu0 0.0
    %165 = vmatprep.subr.mxu0 0.0
    %166 = vmatpush1.msra.mxu0 0.0
    %167 = vmatprep.subr.mxu0 0.0
    %168 = vmatpush1.msra.mxu0 0.0
    %169 = vmatprep.subr.mxu0 0.0
    %170 = vmatpush1.msra.mxu0 0.0
    %171 = vmatprep.subr.mxu0 0.0
    %172 = vmatpush1.msra.mxu0 0.0
    %173 = vmatprep.subr.mxu0 0.0
    %174 = vmatpush1.msra.mxu0 0.0
    %175 = vmatprep.subr.mxu0 0.0
    %176 = vmatpush1.msra.mxu0 0.0
    %177 = vmatprep.subr.mxu0 0.0
    %178 = vmatpush1.msra.mxu0 0.0
    %179 = vmatprep.subr.mxu0 0.0
    %180 = vmatpush1.msra.mxu0 0.0
    %181 = vmatprep.subr.mxu0 0.0
    %182 = vmatpush1.msra.mxu0 0.0
    %183 = vmatprep.subr.mxu0 0.0
    %184 = vmatpush1.msra.mxu0 0.0
    %185 = vmatprep.subr.mxu0 0.0
    %186 = vmatpush1.msra.mxu0 0.0
    %187 = vmatprep.subr.mxu0 0.0
    %188 = vmatpush1.msra.mxu0 0.0
    %189 = vmatprep.subr.mxu0 0.0
    %190 = vmatpush1.msra.mxu0 0.0
    %191 = vmatprep.subr.mxu0 0.0
    %192 = vmatpush1.msra.mxu0 0.0
    %193 = vmatprep.subr.mxu0 0.0
    %194 = vmatpush1.msra.mxu0 0.0
    %195 = vmatprep.subr.mxu0 0.0
    %196 = vmatpush1.msra.mxu0 0.0
    %197 = vmatprep.subr.mxu0 0.0
    %198 = vmatpush1.msra.mxu0 0.0
    %199 = vmatprep.subr.mxu0 0.0
    %200 = vmatpush1.msra.mxu0 0.0
    %201 = vmatprep.subr.mxu0 0.0
    %202 = vmatpush1.msra.mxu0 0.0
    %203 = vmatprep.subr.mxu0 0.0
    %204 = vmatpush1.msra.mxu0 0.0
    %205 = vmatprep.subr.mxu0 0.0
    %206 = vmatpush1.msra.mxu0 0.0
    %207 = vmatprep.subr.mxu0 0.0
    %208 = vmatpush1.msra.mxu0 0.0
    %209 = vmatprep.subr.mxu0 0.0
    %210 = vmatpush1.msra.mxu0 0.0
    %211 = vmatprep.subr.mxu0 0.0
    %212 = vmatpush1.msra.mxu0 0.0
    %213 = vmatprep.subr.mxu0 0.0
    %214 = vmatpush1.msra.mxu0 0.0
    %215 = vmatprep.subr.mxu0 0.0
    %216 = vmatpush1.msra.mxu0 0.0
    %217 = vmatprep.subr.mxu0 0.0
    %218 = vmatpush1.msra.mxu0 0.0
    %219 = vmatprep.subr.mxu0 0.0
    %220 = vmatpush1.msra.mxu0 0.0
    %221 = vmatprep.subr.mxu0 0.0
    %222 = vmatpush1.msra.mxu0 0.0
    %223 = vmatprep.mubr.f32.mxu0 0.0
    %224 = vmatmul.mubr.f32.gmra.mrb[0].mxu0 %v157
    %v225 = vpop.f32.mrb[0].mxu0
    %v226 = vadd.f32 %v138, %v225
    %v227 = vpop.f32.mrb[0].mxu0
    %v228 = vadd.f32 %v142, %v227
    %229 = vdwg.mxu0
    %230 = vmatprep.subr.mxu0 %v128
    %231 = vmatpush1.msra.mxu0 %v127
    %232 = vmatprep.subr.mxu0 %v132
    %233 = vmatpush1.msra.mxu0 %v131
    %234 = vmatprep.subr.mxu0 0.0
    %235 = vmatpush1.msra.mxu0 0.0
    %236 = vmatprep.subr.mxu0 0.0
    %237 = vmatpush1.msra.mxu0 0.0
    %238 = vmatprep.subr.mxu0 0.0
    %239 = vmatpush1.msra.mxu0 0.0
    %240 = vmatprep.subr.mxu0 0.0
    %241 = vmatpush1.msra.mxu0 0.0
    %242 = vmatprep.subr.mxu0 0.0
    %243 = vmatpush1.msra.mxu0 0.0
    %244 = vmatprep.subr.mxu0 0.0
    %245 = vmatpush1.msra.mxu0 0.0
    %246 = vmatprep.subr.mxu0 0.0
    %247 = vmatpush1.msra.mxu0 0.0
    %248 = vmatprep.subr.mxu0 0.0
    %249 = vmatpush1.msra.mxu0 0.0
    %250 = vmatprep.subr.mxu0 0.0
    %251 = vmatpush1.msra.mxu0 0.0
    %252 = vmatprep.subr.mxu0 0.0
    %253 = vmatpush1.msra.mxu0 0.0
    %254 = vmatprep.subr.mxu0 0.0
    %255 = vmatpush1.msra.mxu0 0.0
    %256 = vmatprep.subr.mxu0 0.0
    %257 = vmatpush1.msra.mxu0 0.0
    %258 = vmatprep.subr.mxu0 0.0
    %259 = vmatpush1.msra.mxu0 0.0
    %260 = vmatprep.subr.mxu0 0.0
    %261 = vmatpush1.msra.mxu0 0.0
    %262 = vmatprep.subr.mxu0 0.0
    %263 = vmatpush1.msra.mxu0 0.0
    %264 = vmatprep.subr.mxu0 0.0
    %265 = vmatpush1.msra.mxu0 0.0
    %266 = vmatprep.subr.mxu0 0.0
    %267 = vmatpush1.msra.mxu0 0.0
    %268 = vmatprep.subr.mxu0 0.0
    %269 = vmatpush1.msra.mxu0 0.0
    %270 = vmatprep.subr.mxu0 0.0
    %271 = vmatpush1.msra.mxu0 0.0
    %272 = vmatprep.subr.mxu0 0.0
    %273 = vmatpush1.msra.mxu0 0.0
    %274 = vmatprep.subr.mxu0 0.0
    %275 = vmatpush1.msra.mxu0 0.0
    %276 = vmatprep.subr.mxu0 0.0
    %277 = vmatpush1.msra.mxu0 0.0
    %278 = vmatprep.subr.mxu0 0.0
    %279 = vmatpush1.msra.mxu0 0.0
    %280 = vmatprep.subr.mxu0 0.0
    %281 = vmatpush1.msra.mxu0 0.0
    %282 = vmatprep.subr.mxu0 0.0
    %283 = vmatpush1.msra.mxu0 0.0
    %284 = vmatprep.subr.mxu0 0.0
    %285 = vmatpush1.msra.mxu0 0.0
    %286 = vmatprep.subr.mxu0 0.0
    %287 = vmatpush1.msra.mxu0 0.0
    %288 = vmatprep.subr.mxu0 0.0
    %289 = vmatpush1.msra.mxu0 0.0
    %290 = vmatprep.subr.mxu0 0.0
    %291 = vmatpush1.msra.mxu0 0.0
    %292 = vmatprep.subr.mxu0 0.0
    %293 = vmatpush1.msra.mxu0 0.0
    %294 = vmatprep.mubr.f32.mxu0 0.0
    %295 = vmatmul.mubr.f32.gmra.mrb[0].mxu0 %v157
    %v296 = vpop.f32.mrb[0].mxu0
    %v297 = vadd.f32 %v146, %v296
    %v298 = vpop.f32.mrb[0].mxu0
    %v299 = vadd.f32 %v150, %v298
    %300 = vdwg.mxu0
    %v301 = vmax.f32 %v226, 0.0
    %v302 = vmax.f32 %v228, 0.0
    %v303 = vmax.f32 %v297, 0.0
    %v304 = vmax.f32 %v299, 0.0
    %v305 = vld [vmem:[#allocation6] sm:$0xff]
    %v306 = vld [vmem:[%s4] sm:$0xff]
    %v307 = vld [vmem:[%s5] sm:$0x1]
    %v309 = vlaneseq
    %v310 = vshrl.u32 %v309, 7
    %v311 = vsub.s32 0, %v310
    %v312 = vrot.slane %v307, %v311
    %vm314 = vcmask 64512
    %v316 = vsel %vm314, %v305, 0
    %318 = vmatprep.subr.mxu0 0.0
    %319 = vmatpush1.msra.mxu0 %v306
    %320 = vmatprep.subr.mxu0 0.0
    %321 = vmatpush1.msra.mxu0 0.0
    %322 = vmatprep.subr.mxu0 0.0
    %323 = vmatpush1.msra.mxu0 0.0
    %324 = vmatprep.subr.mxu0 0.0
    %325 = vmatpush1.msra.mxu0 0.0
    %326 = vmatprep.subr.mxu0 0.0
    %327 = vmatpush1.msra.mxu0 0.0
    %328 = vmatprep.subr.mxu0 0.0
    %329 = vmatpush1.msra.mxu0 0.0
    %330 = vmatprep.subr.mxu0 0.0
    %331 = vmatpush1.msra.mxu0 0.0
    %332 = vmatprep.subr.mxu0 0.0
    %333 = vmatpush1.msra.mxu0 0.0
    %334 = vmatprep.subr.mxu0 0.0
    %335 = vmatpush1.msra.mxu0 0.0
    %336 = vmatprep.subr.mxu0 0.0
    %337 = vmatpush1.msra.mxu0 0.0
    %338 = vmatprep.subr.mxu0 0.0
    %339 = vmatpush1.msra.mxu0 0.0
    %340 = vmatprep.subr.mxu0 0.0
    %341 = vmatpush1.msra.mxu0 0.0
    %342 = vmatprep.subr.mxu0 0.0
    %343 = vmatpush1.msra.mxu0 0.0
    %344 = vmatprep.subr.mxu0 0.0
    %345 = vmatpush1.msra.mxu0 0.0
    %346 = vmatprep.subr.mxu0 0.0
    %347 = vmatpush1.msra.mxu0 0.0
    %348 = vmatprep.subr.mxu0 0.0
    %349 = vmatpush1.msra.mxu0 0.0
    %350 = vmatprep.subr.mxu0 0.0
    %351 = vmatpush1.msra.mxu0 0.0
    %352 = vmatprep.subr.mxu0 0.0
    %353 = vmatpush1.msra.mxu0 0.0
    %354 = vmatprep.subr.mxu0 0.0
    %355 = vmatpush1.msra.mxu0 0.0
    %356 = vmatprep.subr.mxu0 0.0
    %357 = vmatpush1.msra.mxu0 0.0
    %358 = vmatprep.subr.mxu0 0.0
    %359 = vmatpush1.msra.mxu0 0.0
    %360 = vmatprep.subr.mxu0 0.0
    %361 = vmatpush1.msra.mxu0 0.0
    %362 = vmatprep.subr.mxu0 0.0
    %363 = vmatpush1.msra.mxu0 0.0
    %364 = vmatprep.subr.mxu0 0.0
    %365 = vmatpush1.msra.mxu0 0.0
    %366 = vmatprep.subr.mxu0 0.0
    %367 = vmatpush1.msra.mxu0 0.0
    %368 = vmatprep.subr.mxu0 0.0
    %369 = vmatpush1.msra.mxu0 0.0
    %370 = vmatprep.subr.mxu0 0.0
    %371 = vmatpush1.msra.mxu0 0.0
    %372 = vmatprep.subr.mxu0 0.0
    %373 = vmatpush1.msra.mxu0 0.0
    %374 = vmatprep.subr.mxu0 0.0
    %375 = vmatpush1.msra.mxu0 0.0
    %376 = vmatprep.subr.mxu0 0.0
    %377 = vmatpush1.msra.mxu0 0.0
    %378 = vmatprep.subr.mxu0 0.0
    %379 = vmatpush1.msra.mxu0 0.0
    %380 = vmatprep.subr.mxu0 0.0
    %381 = vmatpush1.msra.mxu0 0.0
    %382 = vmatprep.mubr.f32.mxu0 0.0
    %383 = vmatmul.mubr.f32.gmra.mrb[0].mxu0 %v316
    %v384 = vpop.f32.mrb[0].mxu0
    %v385 = vadd.f32 %v312, %v384
    %v386 = vpop.f32.mrb[0].mxu0
    %387 = vdwg.mxu0
    %v388 = vmax.f32 %v385, 0.0
    %v389 = vld [vmem:[#allocation9] sm:$0xff]
    %v390 = vld [vmem:[#allocation9 + $0x8] sm:$0xff]
    %v391 = vld [vmem:[#allocation9 + $0x10] sm:$0xff]
    %v392 = vld [vmem:[#allocation9 + $0x18] sm:$0xff]
    %v393 = vld [vmem:[#allocation9 + $0x20] sm:$0xff]
    %v394 = vld [vmem:[#allocation9 + $0x28] sm:$0xff]
    %v395 = vld [vmem:[#allocation9 + $0x30] sm:$0xff]
    %v396 = vld [vmem:[#allocation9 + $0x38] sm:$0xff]
    %v397 = vld [vmem:[#allocation9 + $0x40] sm:$0xff]
    %v398 = vld [vmem:[#allocation9 + $0x48] sm:$0xff]
    %v399 = vld [vmem:[#allocation9 + $0x50] sm:$0xff]
    %v400 = vld [vmem:[#allocation9 + $0x58] sm:$0xff]
    %v401 = vld [vmem:[#allocation9 + $0x60] sm:$0xff]
    %v402 = vld [vmem:[#allocation9 + $0x68] sm:$0xff]
    %v403 = vld [vmem:[#allocation9 + $0x70] sm:$0xff]
    %v404 = vld [vmem:[#allocation9 + $0x78] sm:$0xff]
    %v405 = vld [vmem:[#allocation9 + $0x80] sm:$0xff]
    %v406 = vld [vmem:[#allocation9 + $0x88] sm:$0xff]
    %v407 = vld [vmem:[#allocation9 + $0x90] sm:$0xff]
    %v408 = vld [vmem:[#allocation9 + $0x98] sm:$0xff]
    %v409 = vld [vmem:[#allocation9 + $0xa0] sm:$0xff]
    %v410 = vld [vmem:[#allocation9 + $0xa8] sm:$0xff]
    %v411 = vld [vmem:[#allocation9 + $0xb0] sm:$0xff]
    %v412 = vld [vmem:[#allocation9 + $0xb8] sm:$0xff]
    %v413 = vld [vmem:[#allocation9 + $0xc0] sm:$0xff]
    %v414 = vld [vmem:[#allocation9 + $0xc8] sm:$0xff]
    %v415 = vld [vmem:[#allocation9 + $0xd0] sm:$0xff]
    %v416 = vld [vmem:[#allocation9 + $0xd8] sm:$0xff]
    %v417 = vld [vmem:[#allocation9 + $0xe0] sm:$0xff]
    %v418 = vld [vmem:[#allocation9 + $0xe8] sm:$0xff]
    %v419 = vld [vmem:[#allocation9 + $0xf0] sm:$0xff]
    %v420 = vld [vmem:[#allocation9 + $0xf8] sm:$0xff]
    %v421 = vld [vmem:[#allocation9 + $0x100] sm:$0xff]
    %v422 = vld [vmem:[#allocation9 + $0x108] sm:$0xff]
    %v423 = vld [vmem:[#allocation9 + $0x110] sm:$0xff]
    %v424 = vld [vmem:[#allocation9 + $0x118] sm:$0xff]
    %v425 = vld [vmem:[#allocation9 + $0x120] sm:$0xff]
    %v426 = vld [vmem:[#allocation9 + $0x128] sm:$0xff]
    %v427 = vld [vmem:[#allocation9 + $0x130] sm:$0xff]
    %v428 = vld [vmem:[#allocation9 + $0x138] sm:$0xff]
    %v429 = vld [vmem:[#allocation9 + $0x140] sm:$0xff]
    %v430 = vld [vmem:[#allocation9 + $0x148] sm:$0xff]
    %v431 = vld [vmem:[#allocation9 + $0x150] sm:$0xff]
    %v432 = vld [vmem:[#allocation9 + $0x158] sm:$0xff]
    %v433 = vld [vmem:[#allocation9 + $0x160] sm:$0xff]
    %v434 = vld [vmem:[#allocation9 + $0x168] sm:$0xff]
    %v435 = vld [vmem:[#allocation9 + $0x170] sm:$0xff]
    %v436 = vld [vmem:[#allocation9 + $0x178] sm:$0xff]
    %v437 = vld [vmem:[#allocation9 + $0x180] sm:$0xff]
    %v438 = vld [vmem:[#allocation9 + $0x188] sm:$0xff]
    %v439 = vld [vmem:[#allocation9 + $0x190] sm:$0xff]
    %v440 = vld [vmem:[#allocation9 + $0x198] sm:$0xff]
    %v441 = vld [vmem:[#allocation9 + $0x1a0] sm:$0xff]
    %v442 = vld [vmem:[#allocation9 + $0x1a8] sm:$0xff]
    %v443 = vld [vmem:[#allocation9 + $0x1b0] sm:$0xff]
    %v444 = vld [vmem:[#allocation9 + $0x1b8] sm:$0xff]
    %v445 = vld [vmem:[#allocation9 + $0x1c0] sm:$0xff]
    %v446 = vld [vmem:[#allocation9 + $0x1c8] sm:$0xff]
    %v447 = vld [vmem:[#allocation9 + $0x1d0] sm:$0xff]
    %v448 = vld [vmem:[#allocation9 + $0x1d8] sm:$0xff]
    %v449 = vld [vmem:[#allocation9 + $0x1e0] sm:$0xff]
    %v450 = vld [vmem:[#allocation9 + $0x1e8] sm:$0xff]
    %v451 = vld [vmem:[#allocation9 + $0x1f0] sm:$0xff]
    %v452 = vld [vmem:[#allocation9 + $0x1f8] sm:$0xff]
    %v453 = vld [vmem:[#allocation9 + $0x200] sm:$0xff]
    %v454 = vld [vmem:[#allocation9 + $0x208] sm:$0xff]
    %v455 = vld [vmem:[#allocation9 + $0x210] sm:$0xff]
    %v456 = vld [vmem:[#allocation9 + $0x218] sm:$0xff]
    %v457 = vld [vmem:[#allocation9 + $0x220] sm:$0xff]
    %v458 = vld [vmem:[#allocation9 + $0x228] sm:$0xff]
    %v459 = vld [vmem:[#allocation9 + $0x230] sm:$0xff]
    %v460 = vld [vmem:[#allocation9 + $0x238] sm:$0xff]
    %v461 = vld [vmem:[#allocation9 + $0x240] sm:$0xff]
    %v462 = vld [vmem:[#allocation9 + $0x248] sm:$0xff]
    %v463 = vld [vmem:[#allocation9 + $0x250] sm:$0xff]
    %v464 = vld [vmem:[#allocation9 + $0x258] sm:$0xff]
    %v465 = vld [vmem:[#allocation9 + $0x260] sm:$0xff]
    %v466 = vld [vmem:[#allocation9 + $0x268] sm:$0xff]
    %v467 = vld [vmem:[#allocation9 + $0x270] sm:$0xff]
    %v468 = vld [vmem:[#allocation9 + $0x278] sm:$0xff]
    %v469 = vld [vmem:[#allocation9 + $0x280] sm:$0xff]
    %v470 = vld [vmem:[#allocation9 + $0x288] sm:$0xff]
    %v471 = vld [vmem:[#allocation9 + $0x290] sm:$0xff]
    %v472 = vld [vmem:[#allocation9 + $0x298] sm:$0xff]
    %v473 = vld [vmem:[#allocation9 + $0x2a0] sm:$0xff]
    %v474 = vld [vmem:[#allocation9 + $0x2a8] sm:$0xff]
    %v475 = vld [vmem:[#allocation9 + $0x2b0] sm:$0xff]
    %v476 = vld [vmem:[#allocation9 + $0x2b8] sm:$0xff]
    %v477 = vld [vmem:[#allocation9 + $0x2c0] sm:$0xff]
    %v478 = vld [vmem:[#allocation9 + $0x2c8] sm:$0xff]
    %v479 = vld [vmem:[#allocation9 + $0x2d0] sm:$0xff]
    %v480 = vld [vmem:[#allocation9 + $0x2d8] sm:$0xff]
    %v481 = vld [vmem:[#allocation9 + $0x2e0] sm:$0xff]
    %v482 = vld [vmem:[#allocation9 + $0x2e8] sm:$0xff]
    %v483 = vld [vmem:[#allocation9 + $0x2f0] sm:$0xff]
    %v484 = vld [vmem:[#allocation9 + $0x2f8] sm:$0xff]
    %v485 = vld [vmem:[#allocation9 + $0x300] sm:$0xff]
    %v486 = vld [vmem:[#allocation9 + $0x308] sm:$0xff]
    %v487 = vld [vmem:[#allocation9 + $0x310] sm:$0xff]
    %v488 = vld [vmem:[#allocation9 + $0x318] sm:$0xff]
    %v489 = vld [vmem:[#allocation9 + $0x320] sm:$0xff]
    %v490 = vld [vmem:[#allocation9 + $0x328] sm:$0xff]
    %v491 = vld [vmem:[#allocation9 + $0x330] sm:$0xff]
    %v492 = vld [vmem:[#allocation9 + $0x338] sm:$0xff]
    %v493 = vld [vmem:[#allocation9 + $0x340] sm:$0xff]
    %v494 = vld [vmem:[#allocation9 + $0x348] sm:$0xff]
    %v495 = vld [vmem:[#allocation9 + $0x350] sm:$0xff]
    %v496 = vld [vmem:[#allocation9 + $0x358] sm:$0xff]
    %v497 = vld [vmem:[#allocation9 + $0x360] sm:$0xff]
    %v498 = vld [vmem:[#allocation9 + $0x368] sm:$0xff]
    %v499 = vld [vmem:[#allocation9 + $0x370] sm:$0xff]
    %v500 = vld [vmem:[#allocation9 + $0x378] sm:$0xff]
    %v501 = vld [vmem:[#allocation9 + $0x380] sm:$0xff]
    %v502 = vld [vmem:[#allocation9 + $0x388] sm:$0xff]
    %v503 = vld [vmem:[#allocation9 + $0x390] sm:$0xff]
    %v504 = vld [vmem:[#allocation9 + $0x398] sm:$0xff]
    %v505 = vld [vmem:[#allocation9 + $0x3a0] sm:$0xff]
    %v506 = vld [vmem:[#allocation9 + $0x3a8] sm:$0xff]
    %v507 = vld [vmem:[#allocation9 + $0x3b0] sm:$0xff]
    %v508 = vld [vmem:[#allocation9 + $0x3b8] sm:$0xff]
    %v509 = vld [vmem:[#allocation9 + $0x3c0] sm:$0xff]
    %v510 = vld [vmem:[#allocation9 + $0x3c8] sm:$0xff]
    %v511 = vld [vmem:[#allocation9 + $0x3d0] sm:$0xff]
    %v512 = vld [vmem:[#allocation9 + $0x3d8] sm:$0xff]
    %v513 = vld [vmem:[#allocation9 + $0x3e0] sm:$0xff]
    %v514 = vld [vmem:[#allocation9 + $0x3e8] sm:$0xff]
    %v515 = vld [vmem:[#allocation9 + $0x3f0] sm:$0xff]
    %v516 = vld [vmem:[#allocation9 + $0x3f8] sm:$0xff]
    %v517 = vld [vmem:[%s7] sm:$0x3]
    %v519 = vlaneseq
    %v520 = vshrl.u32 %v519, 7
    %v521 = vsub.s32 0, %v520
    %v522 = vrot.slane %v517, %v521
    %v523 = vlaneseq
    %v524 = vshrl.u32 %v523, 7
    %v525 = vsub.s32 1, %v524
    %v526 = vrot.slane %v517, %v525
    %529 = vmatprep.subr.mxu0 %v390
    %530 = vmatpush1.msra.mxu0 %v389
    %531 = vmatprep.subr.mxu0 %v392
    %532 = vmatpush1.msra.mxu0 %v391
    %533 = vmatprep.subr.mxu0 %v394
    %534 = vmatpush1.msra.mxu0 %v393
    %535 = vmatprep.subr.mxu0 %v396
    %536 = vmatpush1.msra.mxu0 %v395
    %537 = vmatprep.subr.mxu0 %v398
    %538 = vmatpush1.msra.mxu0 %v397
    %539 = vmatprep.subr.mxu0 %v400
    %540 = vmatpush1.msra.mxu0 %v399
    %541 = vmatprep.subr.mxu0 %v402
    %542 = vmatpush1.msra.mxu0 %v401
    %543 = vmatprep.subr.mxu0 %v404
    %544 = vmatpush1.msra.mxu0 %v403
    %545 = vmatprep.subr.mxu0 %v406
    %546 = vmatpush1.msra.mxu0 %v405
    %547 = vmatprep.subr.mxu0 %v408
    %548 = vmatpush1.msra.mxu0 %v407
    %549 = vmatprep.subr.mxu0 %v410
    %550 = vmatpush1.msra.mxu0 %v409
    %551 = vmatprep.subr.mxu0 %v412
    %552 = vmatpush1.msra.mxu0 %v411
    %553 = vmatprep.subr.mxu0 %v414
    %554 = vmatpush1.msra.mxu0 %v413
    %555 = vmatprep.subr.mxu0 %v416
    %556 = vmatpush1.msra.mxu0 %v415
    %557 = vmatprep.subr.mxu0 %v418
    %558 = vmatpush1.msra.mxu0 %v417
    %559 = vmatprep.subr.mxu0 %v420
    %560 = vmatpush1.msra.mxu0 %v419
    %561 = vmatprep.subr.mxu0 %v422
    %562 = vmatpush1.msra.mxu0 %v421
    %563 = vmatprep.subr.mxu0 %v424
    %564 = vmatpush1.msra.mxu0 %v423
    %565 = vmatprep.subr.mxu0 %v426
    %566 = vmatpush1.msra.mxu0 %v425
    %567 = vmatprep.subr.mxu0 %v428
    %568 = vmatpush1.msra.mxu0 %v427
    %569 = vmatprep.subr.mxu0 %v430
    %570 = vmatpush1.msra.mxu0 %v429
    %571 = vmatprep.subr.mxu0 %v432
    %572 = vmatpush1.msra.mxu0 %v431
    %573 = vmatprep.subr.mxu0 %v434
    %574 = vmatpush1.msra.mxu0 %v433
    %575 = vmatprep.subr.mxu0 %v436
    %576 = vmatpush1.msra.mxu0 %v435
    %577 = vmatprep.subr.mxu0 %v438
    %578 = vmatpush1.msra.mxu0 %v437
    %579 = vmatprep.subr.mxu0 %v440
    %580 = vmatpush1.msra.mxu0 %v439
    %581 = vmatprep.subr.mxu0 %v442
    %582 = vmatpush1.msra.mxu0 %v441
    %583 = vmatprep.subr.mxu0 %v444
    %584 = vmatpush1.msra.mxu0 %v443
    %585 = vmatprep.subr.mxu0 %v446
    %586 = vmatpush1.msra.mxu0 %v445
    %587 = vmatprep.subr.mxu0 %v448
    %588 = vmatpush1.msra.mxu0 %v447
    %589 = vmatprep.subr.mxu0 %v450
    %590 = vmatpush1.msra.mxu0 %v449
    %591 = vmatprep.subr.mxu0 %v452
    %592 = vmatpush1.msra.mxu0 %v451
    %593 = vmatprep.mubr.f32.mxu0 %v302
    %594 = vmatmul.mubr.f32.gmra.mrb[0].mxu0 %v301
    %v595 = vpop.f32.mrb[0].mxu0
    %v596 = vadd.f32 %v522, %v595
    %v597 = vpop.f32.mrb[0].mxu0
    %v598 = vadd.f32 %v526, %v597
    %599 = vdwg.mxu0
    %600 = vmatprep.subr.mxu0 %v454
    %601 = vmatpush1.msra.mxu0 %v453
    %602 = vmatprep.subr.mxu0 %v456
    %603 = vmatpush1.msra.mxu0 %v455
    %604 = vmatprep.subr.mxu0 %v458
    %605 = vmatpush1.msra.mxu0 %v457
    %606 = vmatprep.subr.mxu0 %v460
    %607 = vmatpush1.msra.mxu0 %v459
    %608 = vmatprep.subr.mxu0 %v462
    %609 = vmatpush1.msra.mxu0 %v461
    %610 = vmatprep.subr.mxu0 %v464
    %611 = vmatpush1.msra.mxu0 %v463
    %612 = vmatprep.subr.mxu0 %v466
    %613 = vmatpush1.msra.mxu0 %v465
    %614 = vmatprep.subr.mxu0 %v468
    %615 = vmatpush1.msra.mxu0 %v467
    %616 = vmatprep.subr.mxu0 %v470
    %617 = vmatpush1.msra.mxu0 %v469
    %618 = vmatprep.subr.mxu0 %v472
    %619 = vmatpush1.msra.mxu0 %v471
    %620 = vmatprep.subr.mxu0 %v474
    %621 = vmatpush1.msra.mxu0 %v473
    %622 = vmatprep.subr.mxu0 %v476
    %623 = vmatpush1.msra.mxu0 %v475
    %624 = vmatprep.subr.mxu0 %v478
    %625 = vmatpush1.msra.mxu0 %v477
    %626 = vmatprep.subr.mxu0 %v480
    %627 = vmatpush1.msra.mxu0 %v479
    %628 = vmatprep.subr.mxu0 %v482
    %629 = vmatpush1.msra.mxu0 %v481
    %630 = vmatprep.subr.mxu0 %v484
    %631 = vmatpush1.msra.mxu0 %v483
    %632 = vmatprep.subr.mxu0 %v486
    %633 = vmatpush1.msra.mxu0 %v485
    %634 = vmatprep.subr.mxu0 %v488
    %635 = vmatpush1.msra.mxu0 %v487
    %636 = vmatprep.subr.mxu0 %v490
    %637 = vmatpush1.msra.mxu0 %v489
    %638 = vmatprep.subr.mxu0 %v492
    %639 = vmatpush1.msra.mxu0 %v491
    %640 = vmatprep.subr.mxu0 %v494
    %641 = vmatpush1.msra.mxu0 %v493
    %642 = vmatprep.subr.mxu0 %v496
    %643 = vmatpush1.msra.mxu0 %v495
    %644 = vmatprep.subr.mxu0 %v498
    %645 = vmatpush1.msra.mxu0 %v497
    %646 = vmatprep.subr.mxu0 %v500
    %647 = vmatpush1.msra.mxu0 %v499
    %648 = vmatprep.subr.mxu0 %v502
    %649 = vmatpush1.msra.mxu0 %v501
    %650 = vmatprep.subr.mxu0 %v504
    %651 = vmatpush1.msra.mxu0 %v503
    %652 = vmatprep.subr.mxu0 %v506
    %653 = vmatpush1.msra.mxu0 %v505
    %654 = vmatprep.subr.mxu0 %v508
    %655 = vmatpush1.msra.mxu0 %v507
    %656 = vmatprep.subr.mxu0 %v510
    %657 = vmatpush1.msra.mxu0 %v509
    %658 = vmatprep.subr.mxu0 %v512
    %659 = vmatpush1.msra.mxu0 %v511
    %660 = vmatprep.subr.mxu0 %v514
    %661 = vmatpush1.msra.mxu0 %v513
    %662 = vmatprep.subr.mxu0 %v516
    %663 = vmatpush1.msra.mxu0 %v515
    %664 = vmatprep.mubr.f32.mxu0 %v304
    %665 = vmatmul.mubr.f32.gmra.mrb[0].mxu0 %v303
    %v666 = vpop.f32.mrb[0].mxu0
    %v667 = vadd.f32 %v596, %v666
    %v668 = vpop.f32.mrb[0].mxu0
    %v669 = vadd.f32 %v598, %v668
    %670 = vdwg.mxu0
    %v671 = vmax.f32 %v667, 0.0
    %v672 = vmax.f32 %v669, 0.0
    %v673 = vld [vmem:[#allocation11] sm:$0xff]
    %v674 = vld [vmem:[#allocation11 + $0x8] sm:$0xff]
    %v675 = vld [vmem:[#allocation11 + $0x10] sm:$0xff]
    %v676 = vld [vmem:[#allocation11 + $0x18] sm:$0xff]
    %v677 = vld [vmem:[#allocation11 + $0x20] sm:$0xff]
    %v678 = vld [vmem:[#allocation11 + $0x28] sm:$0xff]
    %v679 = vld [vmem:[#allocation11 + $0x30] sm:$0xff]
    %v680 = vld [vmem:[#allocation11 + $0x38] sm:$0xff]
    %v681 = vld [vmem:[#allocation11 + $0x40] sm:$0xff]
    %v682 = vld [vmem:[#allocation11 + $0x48] sm:$0xff]
    %v683 = vld [vmem:[#allocation11 + $0x50] sm:$0xff]
    %v684 = vld [vmem:[#allocation11 + $0x58] sm:$0xff]
    %v685 = vld [vmem:[#allocation11 + $0x60] sm:$0xff]
    %v686 = vld [vmem:[#allocation11 + $0x68] sm:$0xff]
    %v687 = vld [vmem:[#allocation11 + $0x70] sm:$0xff]
    %v688 = vld [vmem:[#allocation11 + $0x78] sm:$0xff]
    %v689 = vld [vmem:[#allocation11 + $0x80] sm:$0xff]
    %v690 = vld [vmem:[#allocation11 + $0x88] sm:$0xff]
    %v691 = vld [vmem:[#allocation11 + $0x90] sm:$0xff]
    %v692 = vld [vmem:[#allocation11 + $0x98] sm:$0xff]
    %v693 = vld [vmem:[#allocation11 + $0xa0] sm:$0xff]
    %v694 = vld [vmem:[#allocation11 + $0xa8] sm:$0xff]
    %v695 = vld [vmem:[#allocation11 + $0xb0] sm:$0xff]
    %v696 = vld [vmem:[#allocation11 + $0xb8] sm:$0xff]
    %v697 = vld [vmem:[#allocation11 + $0xc0] sm:$0xff]
    %v698 = vld [vmem:[#allocation11 + $0xc8] sm:$0xff]
    %v699 = vld [vmem:[#allocation11 + $0xd0] sm:$0xff]
    %v700 = vld [vmem:[#allocation11 + $0xd8] sm:$0xff]
    %v701 = vld [vmem:[#allocation11 + $0xe0] sm:$0xff]
    %v702 = vld [vmem:[#allocation11 + $0xe8] sm:$0xff]
    %v703 = vld [vmem:[#allocation11 + $0xf0] sm:$0xff]
    %v704 = vld [vmem:[#allocation11 + $0xf8] sm:$0xff]
    %v705 = vld [vmem:[#allocation12] sm:$0xff]
    %v706 = vld [vmem:[#allocation12 + $0x8] sm:$0xff]
    %v707 = vld [vmem:[#allocation12 + $0x10] sm:$0xff]
    %v708 = vld [vmem:[#allocation12 + $0x18] sm:$0xff]
    %v709 = vld [vmem:[#allocation12 + $0x20] sm:$0xff]
    %v710 = vld [vmem:[#allocation12 + $0x28] sm:$0xff]
    %v711 = vld [vmem:[#allocation12 + $0x30] sm:$0xff]
    %v712 = vld [vmem:[#allocation12 + $0x38] sm:$0xff]
    %v713 = vld [vmem:[#allocation12 + $0x40] sm:$0xff]
    %v714 = vld [vmem:[#allocation12 + $0x48] sm:$0xff]
    %v715 = vld [vmem:[#allocation12 + $0x50] sm:$0xff]
    %v716 = vld [vmem:[#allocation12 + $0x58] sm:$0xff]
    %v717 = vld [vmem:[#allocation12 + $0x60] sm:$0xff]
    %v718 = vld [vmem:[#allocation12 + $0x68] sm:$0xff]
    %v719 = vld [vmem:[#allocation12 + $0x70] sm:$0xff]
    %v720 = vld [vmem:[#allocation12 + $0x78] sm:$0xff]
    %721 = vmatprep.subr.mxu0 0.0
    %722 = vmatpush1.msra.mxu0 %v705
    %723 = vmatprep.subr.mxu0 0.0
    %724 = vmatpush1.msra.mxu0 %v706
    %725 = vmatprep.subr.mxu0 0.0
    %726 = vmatpush1.msra.mxu0 %v707
    %727 = vmatprep.subr.mxu0 0.0
    %728 = vmatpush1.msra.mxu0 %v708
    %729 = vmatprep.subr.mxu0 0.0
    %730 = vmatpush1.msra.mxu0 %v709
    %731 = vmatprep.subr.mxu0 0.0
    %732 = vmatpush1.msra.mxu0 %v710
    %733 = vmatprep.subr.mxu0 0.0
    %734 = vmatpush1.msra.mxu0 %v711
    %735 = vmatprep.subr.mxu0 0.0
    %736 = vmatpush1.msra.mxu0 %v712
    %737 = vmatprep.subr.mxu0 0.0
    %738 = vmatpush1.msra.mxu0 %v713
    %739 = vmatprep.subr.mxu0 0.0
    %740 = vmatpush1.msra.mxu0 %v714
    %741 = vmatprep.subr.mxu0 0.0
    %742 = vmatpush1.msra.mxu0 %v715
    %743 = vmatprep.subr.mxu0 0.0
    %744 = vmatpush1.msra.mxu0 %v716
    %745 = vmatprep.subr.mxu0 0.0
    %746 = vmatpush1.msra.mxu0 %v717
    %747 = vmatprep.subr.mxu0 0.0
    %748 = vmatpush1.msra.mxu0 %v718
    %749 = vmatprep.subr.mxu0 0.0
    %750 = vmatpush1.msra.mxu0 %v719
    %751 = vmatprep.subr.mxu0 0.0
    %752 = vmatpush1.msra.mxu0 %v720
    %753 = vmatprep.subr.mxu0 0.0
    %754 = vmatpush1.msra.mxu0 0.0
    %755 = vmatprep.subr.mxu0 0.0
    %756 = vmatpush1.msra.mxu0 0.0
    %757 = vmatprep.subr.mxu0 0.0
    %758 = vmatpush1.msra.mxu0 0.0
    %759 = vmatprep.subr.mxu0 0.0
    %760 = vmatpush1.msra.mxu0 0.0
    %761 = vmatprep.subr.mxu0 0.0
    %762 = vmatpush1.msra.mxu0 0.0
    %763 = vmatprep.subr.mxu0 0.0
    %764 = vmatpush1.msra.mxu0 0.0
    %765 = vmatprep.subr.mxu0 0.0
    %766 = vmatpush1.msra.mxu0 0.0
    %767 = vmatprep.subr.mxu0 0.0
    %768 = vmatpush1.msra.mxu0 0.0
    %769 = vmatprep.subr.mxu0 0.0
    %770 = vmatpush1.msra.mxu0 0.0
    %771 = vmatprep.subr.mxu0 0.0
    %772 = vmatpush1.msra.mxu0 0.0
    %773 = vmatprep.subr.mxu0 0.0
    %774 = vmatpush1.msra.mxu0 0.0
    %775 = vmatprep.subr.mxu0 0.0
    %776 = vmatpush1.msra.mxu0 0.0
    %777 = vmatprep.subr.mxu0 0.0
    %778 = vmatpush1.msra.mxu0 0.0
    %779 = vmatprep.subr.mxu0 0.0
    %780 = vmatpush1.msra.mxu0 0.0
    %781 = vmatprep.subr.mxu0 0.0
    %782 = vmatpush1.msra.mxu0 0.0
    %783 = vmatprep.subr.mxu0 0.0
    %784 = vmatpush1.msra.mxu0 0.0
    %785 = vmatprep.mubr.f32.mxu0 0.0
    %786 = vmatmul.mubr.f32.gmra.mrb[0].mxu0 %v388
    %v787 = vpop.f32.mrb[0].mxu0
    %v788 = vadd.f32 0.0, %v787
    %v789 = vpop.f32.mrb[0].mxu0
    %790 = vdwg.mxu0
    %791 = vmatprep.subr.mxu0 0.0
    %792 = vmatpush1.msra.mxu0 %v673
    %793 = vmatprep.subr.mxu0 0.0
    %794 = vmatpush1.msra.mxu0 %v674
    %795 = vmatprep.subr.mxu0 0.0
    %796 = vmatpush1.msra.mxu0 %v675
    %797 = vmatprep.subr.mxu0 0.0
    %798 = vmatpush1.msra.mxu0 %v676
    %799 = vmatprep.subr.mxu0 0.0
    %800 = vmatpush1.msra.mxu0 %v677
    %801 = vmatprep.subr.mxu0 0.0
    %802 = vmatpush1.msra.mxu0 %v678
    %803 = vmatprep.subr.mxu0 0.0
    %804 = vmatpush1.msra.mxu0 %v679
    %805 = vmatprep.subr.mxu0 0.0
    %806 = vmatpush1.msra.mxu0 %v680
    %807 = vmatprep.subr.mxu0 0.0
    %808 = vmatpush1.msra.mxu0 %v681
    %809 = vmatprep.subr.mxu0 0.0
    %810 = vmatpush1.msra.mxu0 %v682
    %811 = vmatprep.subr.mxu0 0.0
    %812 = vmatpush1.msra.mxu0 %v683
    %813 = vmatprep.subr.mxu0 0.0
    %814 = vmatpush1.msra.mxu0 %v684
    %815 = vmatprep.subr.mxu0 0.0
    %816 = vmatpush1.msra.mxu0 %v685
    %817 = vmatprep.subr.mxu0 0.0
    %818 = vmatpush1.msra.mxu0 %v686
    %819 = vmatprep.subr.mxu0 0.0
    %820 = vmatpush1.msra.mxu0 %v687
    %821 = vmatprep.subr.mxu0 0.0
    %822 = vmatpush1.msra.mxu0 %v688
    %823 = vmatprep.subr.mxu0 0.0
    %824 = vmatpush1.msra.mxu0 %v689
    %825 = vmatprep.subr.mxu0 0.0
    %826 = vmatpush1.msra.mxu0 %v690
    %827 = vmatprep.subr.mxu0 0.0
    %828 = vmatpush1.msra.mxu0 %v691
    %829 = vmatprep.subr.mxu0 0.0
    %830 = vmatpush1.msra.mxu0 %v692
    %831 = vmatprep.subr.mxu0 0.0
    %832 = vmatpush1.msra.mxu0 %v693
    %833 = vmatprep.subr.mxu0 0.0
    %834 = vmatpush1.msra.mxu0 %v694
    %835 = vmatprep.subr.mxu0 0.0
    %836 = vmatpush1.msra.mxu0 %v695
    %837 = vmatprep.subr.mxu0 0.0
    %838 = vmatpush1.msra.mxu0 %v696
    %839 = vmatprep.subr.mxu0 0.0
    %840 = vmatpush1.msra.mxu0 %v697
    %841 = vmatprep.subr.mxu0 0.0
    %842 = vmatpush1.msra.mxu0 %v698
    %843 = vmatprep.subr.mxu0 0.0
    %844 = vmatpush1.msra.mxu0 %v699
    %845 = vmatprep.subr.mxu0 0.0
    %846 = vmatpush1.msra.mxu0 %v700
    %847 = vmatprep.subr.mxu0 0.0
    %848 = vmatpush1.msra.mxu0 %v701
    %849 = vmatprep.subr.mxu0 0.0
    %850 = vmatpush1.msra.mxu0 %v702
    %851 = vmatprep.subr.mxu0 0.0
    %852 = vmatpush1.msra.mxu0 %v703
    %853 = vmatprep.subr.mxu0 0.0
    %854 = vmatpush1.msra.mxu0 %v704
    %855 = vmatprep.mubr.f32.mxu0 %v672
    %856 = vmatmul.mubr.f32.gmra.mrb[0].mxu0 %v671
    %v857 = vpop.f32.mrb[0].mxu0
    %v858 = vadd.f32 %v788, %v857
    %v859 = vpop.f32.mrb[0].mxu0
    %860 = vdwg.mxu0
    %v861 = vld [vmem:[%s10] sm:$0x1]
    %v863 = vlaneseq
    %v864 = vshrl.u32 %v863, 7
    %v865 = vsub.s32 0, %v864
    %v866 = vrot.slane %v861, %v865
    %v868 = vadd.f32 %v858, %v866
    %v869 = vmax.f32 %v868, 0.0
    %v870 = vld [vmem:[%s11] sm:$0x1]
    %v872 = vlaneseq
    %v873 = vshrl.u32 %v872, 7
    %v874 = vsub.s32 0, %v873
    %v875 = vrot.slane %v870, %v874
    %v877 = vmul.f32 %v869, %v875
    %878 = vadd.xlane.f32.xlu0 %v877
    %v879 = vpop.xlane.xlu0 %878
    %s880 = sld [smem:[#allocation2]]
    %v881 = vstv %s880
    %v882 = vadd.f32 %v879, %v881
    %v883 = vmul.f32 %v882, 0.001
    %v884 = vtanh.pop %v883
    %v885 = vmul.f32 %v884, 10.0
    %v887 = vlaneseq
    %v888 = vand.u32 %v887, 127
    %v889 = vlaneseq
    %v890 = vshrl.u32 %v889, 7
    %v891 = vsub.s32 %v888, %v890
    %v892 = vrot.slane %v885, %v891
    %vm894 = vcmask 57344
    %895 = vst.msk [vmem:[#allocation14] sm:$0x1] %vm894, %v892
    // Predicated region
    $region78: #{tpu_custom_call.1} parent=1 // pred_check
      _
    $region79: #{tpu_custom_call.1} parent=1 // pred_check_branch
      %897 = sbr.rel (0) target = $region81
    $region80: #{tpu_custom_call.1} parent=1 // pred_region
      %s899 = ssub.s32 16, 16
      %900 = vsyncadd [#allocation5], %s899
      %s902 = sshll.u32 [#allocation14], 4
      %s903 = int_to_ptr.vmem [resolvable:$true] %s902
      %905 = dma.vmem_to_hbm [thread:$0]  %s903, 16, %s13, [#allocation5]
    $region81: #{tpu_custom_call.1} parent=1 // pred_fallthru
      _
    // Predicated region
    $region82: #{tpu_custom_call.1} parent=1 // pred_check
      _
    $region83: #{tpu_custom_call.1} parent=1 // pred_check_branch
      %907 = sbr.rel (0) target = $region85
    $region84: #{tpu_custom_call.1} parent=1 // pred_region
      %908 = dma.done [#allocation5], 16
    $region85: #{tpu_custom_call.1} parent=1 // pred_fallthru
      _
    %909 = vsyncpa [#allocation4], 1
    %910 = vsyncpa [#allocation7], 1
    %911 = vsyncpa [#allocation10], 1
    %912 = vsyncpa [#allocation13], 1
    %913 = vsyncpa [#allocation5], 1

</llo_original>
